<compile_context>
chip_gen: v5e
topology: v5e:2x2
jax: 0.10.0
libtpu: 0.0.40
codegen_flags: <defaults>
</compile_context>

<pallas_src>
import functools

import jax
import jax.numpy as jnp
from jax.experimental import pallas as pl
from jax.experimental.pallas import tpu as pltpu


def _round_up(a, b):
    return -(-a // b) * b


def _stack_dilate_kernel(xa_ref, xb_ref, w_ref, b_ref, o_ref, *,
                         col_offsets, C_out_pad, L_tile):
    # xa_ref: (C_in_pad, L_tile)   current x tile
    # xb_ref: (C_in_pad, L_tile)   next x tile (provides the conv halo)
    # w_ref : (B*C_out_pad, K*C_in_pad)  stacked im2col weights (resident)
    # b_ref : (B*C_out_pad, 1)     f32 biases (resident)
    # o_ref : (B*C_out_pad, L_tile)
    window = jnp.concatenate([xa_ref[...], xb_ref[...]], axis=-1)  # (C_in_pad, 2*L_tile)

    for i, offs in enumerate(col_offsets):          # branches (static unroll)
        # im2col RHS: K statically-shifted slices stacked on the contraction axis.
        rhs = jnp.concatenate([window[:, off:off + L_tile] for off in offs], axis=0)
        r0 = i * C_out_pad
        acc = jnp.dot(w_ref[r0:r0 + C_out_pad, :], rhs,
                      preferred_element_type=jnp.float32)          # (C_out_pad, L_tile)
        acc = acc + b_ref[r0:r0 + C_out_pad, :]                    # single bias add
        # Sublane-aligned rows, lane-dense columns -> unmasked full-tile store.
        o_ref[r0:r0 + C_out_pad, :] = acc.astype(o_ref.dtype)


def g_stack_dilate_block(x, weights, biases, neg_paddings, dilations, stride=1,
                         *, compute_dtype=None, l_tile_cap=512):
    """Forward of G_StackDilateBlock, fused into one pallas_call.

    x: (N, C_in, L_in); weights[i]: (C_in, C_out, K) [PyTorch ConvTranspose1d layout];
    biases[i]: (C_out,).  Returns (N, n_branches*C_out, L_trim).
    """
    assert stride == 1  # TODO(synk): strided scatter for stride > 1
    N, C_in, L_in = x.shape
    B = len(dilations)
    assert len(neg_paddings) == B
    C_out, K = int(weights[0].shape[1]), int(weights[0].shape[2])
    for w in weights:
        assert w.shape == (C_in, C_out, K)
    cdt = jnp.dtype(compute_dtype) if compute_dtype is not None else x.dtype
    out_dtype = x.dtype

    # Trimmed output length per branch; channel concat requires them to match.
    L_trims = [(L_in - 1) * stride + int(d) * (K - 1) + 1 - int(p)
               for d, p in zip(dilations, neg_paddings)]
    L_trim = L_trims[0]
    assert all(lt == L_trim for lt in L_trims), "all branches must trim to equal length"
    assert L_trim > 0

    # Gather (correlation) form:
    #   out_i[o, l] = b_i[o] + sum_{k,c} W_i[c,o,k] * x[c, l + neg_pad_i - k*d_i]
    # (zero contribution when the x index falls outside [0, L_in) -> zero padding).
    shifts = [[int(neg_paddings[i]) - k * int(dilations[i]) for k in range(K)]
              for i in range(B)]
    min_s = min(min(s) for s in shifts)
    max_s = max(max(s) for s in shifts)
    pad_l = max(0, -min_s)
    halo = pad_l + max_s                                   # columns needed past each tile
    col_offsets = tuple(tuple(pad_l + s for s in row) for row in shifts)

    # ---------------- tile sizes ((8,128)-aligned) ----------------
    C_in_pad = _round_up(C_in, 8)
    C_out_pad = _round_up(C_out, 8)
    R = B * C_out_pad
    L_tile = min(_round_up(l_tile_cap, 128), _round_up(L_trim, 128))
    L_tile = max(L_tile, _round_up(max(halo, 1), 128))     # halo must fit in the next tile
    num_l = pl.cdiv(L_trim, L_tile)
    L_pad = num_l * L_tile
    # Padded x length: holds the data, every accessed column, and one extra
    # L_tile block so the "next tile" (halo) spec never indexes out of range.
    Lp = max(_round_up(pad_l + L_in, L_tile), (num_l + 1) * L_tile)

    # ---------------- one-time host-side prep ----------------
    xp = jnp.zeros((N, C_in_pad, Lp), cdt)
    xp = xp.at[:, :C_in, pad_l:pad_l + L_in].set(x.astype(cdt))

    # Per-branch im2col weights: W2[i][o, k*C_in_pad + c] = W_i[c, o, k]
    w2 = jnp.zeros((B, C_out_pad, K, C_in_pad), cdt)
    for i, w in enumerate(weights):
        w2 = w2.at[i, :C_out, :, :C_in].set(jnp.transpose(jnp.asarray(w, cdt), (1, 2, 0)))
    w_all = w2.reshape(R, K * C_in_pad)

    b2 = jnp.zeros((B, C_out_pad), jnp.float32)
    for i, b in enumerate(biases):
        b2 = b2.at[i, :C_out].set(jnp.asarray(b, jnp.float32))
    b_all = b2.reshape(R, 1)

    kernel = functools.partial(_stack_dilate_kernel, col_offsets=col_offsets,
                               C_out_pad=C_out_pad, L_tile=L_tile)

    # Rough VMEM budget (double-buffered blocks + f32 transients) for the limit hint.
    isz = jnp.dtype(cdt).itemsize
    vmem_est = (2 * 2 * C_in_pad * L_tile * isz                 # two x specs
                + 2 * R * K * C_in_pad * isz                    # weights
                + 2 * R * 4                                     # bias
                + 2 * R * L_tile * jnp.dtype(out_dtype).itemsize
                + 4 * (2 * C_in_pad + B * K * C_in_pad + R) * L_tile)
    vmem_limit = int(min(64 * 2 ** 20, max(32 * 2 ** 20, 2 * vmem_est)))

    out = pl.pallas_call(
        kernel,
        out_shape=jax.ShapeDtypeStruct((N, R, L_pad), out_dtype),
        grid=(N, num_l),
        in_specs=[
            pl.BlockSpec((None, C_in_pad, L_tile), lambda n, l: (n, 0, l)),      # x tile l
            pl.BlockSpec((None, C_in_pad, L_tile), lambda n, l: (n, 0, l + 1)),  # halo tile l+1
            pl.BlockSpec((R, K * C_in_pad), lambda n, l: (0, 0)),                # weights (resident)
            pl.BlockSpec((R, 1), lambda n, l: (0, 0)),                           # bias (resident)
        ],
        out_specs=pl.BlockSpec((None, R, L_tile), lambda n, l: (n, 0, l)),
        compiler_params=pltpu.CompilerParams(
            dimension_semantics=("parallel", "parallel"),
            vmem_limit_bytes=vmem_limit),
    )(xp, xp, w_all, b_all)

    # Strip channel/length padding (no-op when C_out % 8 == 0 and L_trim % 128 == 0).
    if C_out_pad != C_out or L_pad != L_trim:
        out = out.reshape(N, B, C_out_pad, L_pad)[:, :, :C_out, :L_trim]
        out = out.reshape(N, B * C_out, L_trim)
    return out


# ---------------- pure-JAX reference (for correctness check) ----------------
def conv_transpose1d_ref(x, w, b, stride, dilation):
    N, C_in, L = x.shape
    _, C_out, K = w.shape
    L_out = (L - 1) * stride + dilation * (K - 1) + 1
    out = jnp.zeros((N, C_out, L_out), jnp.float32) + b[None, :, None]
    for k in range(K):
        yk = jnp.einsum("ncl,co->nol", x, w[:, :, k])
        out = out.at[:, :, k * dilation: k * dilation + (L - 1) * stride + 1: stride].add(yk)
    return out


def g_stack_dilate_block_ref(x, weights, biases, neg_paddings, dilations, stride):
    outs = []
    for i, d in enumerate(dilations):
        y = conv_transpose1d_ref(x, weights[i], biases[i], stride, d)
        outs.append(y[:, :, int(neg_paddings[i]):])
    return jnp.concatenate(outs, axis=1)


if __name__ == "__main__":
    # Small config consistent with the module's __init__.
    N, in_c, L_in = 2, 4, 16
    out_c_per = 4
    kernel_size = 3
    stride = 1
    dilations = [1, 2, 4]
    neg_paddings = [d * (kernel_size - 1) for d in dilations]  # every branch trims back to L_in

    key = jax.random.PRNGKey(0)
    kx, *kws = jax.random.split(key, 1 + 2 * len(dilations))

    x = jax.random.normal(kx, (N, in_c, L_in), dtype=jnp.float32)

    # Deterministic parameter init (PyTorch-style uniform bound), one (weight, bias) per branch.
    bound = 1.0 / (in_c * kernel_size) ** 0.5
    weights, biases = [], []
    for i in range(len(dilations)):
        w = jax.random.uniform(kws[2 * i], (in_c, out_c_per, kernel_size),
                               minval=-bound, maxval=bound, dtype=jnp.float32)
        b = jax.random.uniform(kws[2 * i + 1], (out_c_per,),
                               minval=-bound, maxval=bound, dtype=jnp.float32)
        weights.append(w)
        biases.append(b)

    out = g_stack_dilate_block(x, weights, biases, neg_paddings, dilations, stride)
    out = jax.block_until_ready(out)

    ref = g_stack_dilate_block_ref(x, weights, biases, neg_paddings, dilations, stride)
    assert out.shape == (N, out_c_per * len(dilations), L_in), out.shape
    err = float(jnp.max(jnp.abs(out - ref)))
    assert jnp.allclose(out, ref, atol=1e-4, rtol=1e-4), err

    print("KERNEL_OK")
</pallas_src>

<mosaic_0001>
module attributes {stable_mosaic.version = 11 : i64} {
  func.func @_stack_dilate_kernel(%arg0: i32, %arg1: i32, %arg2: memref<1x8x128xf32, #tpu.memory_space<vmem>>, %arg3: memref<1x8x128xf32, #tpu.memory_space<vmem>>, %arg4: memref<24x24xf32, #tpu.memory_space<vmem>>, %arg5: memref<24x1xf32, #tpu.memory_space<vmem>>, %arg6: memref<1x24x128xf32, #tpu.memory_space<vmem>>) attributes {dimension_semantics = [#tpu.dimension_semantics<parallel>, #tpu.dimension_semantics<parallel>], iteration_bounds = array<i64: 2, 1>, scalar_prefetch = 0 : i64, scratch_operands = 0 : i64, tpu.core_type = #tpu.core_type<tc>, window_params = [{transform_indices = @transform_0, window_bounds = array<i64: 1, 8, 128>}, {transform_indices = @transform_1, window_bounds = array<i64: 1, 8, 128>}, {pipeline_mode = #tpu.pipeline_mode<synchronous>, transform_indices = @transform_2, window_bounds = array<i64: 24, 24>}, {pipeline_mode = #tpu.pipeline_mode<synchronous>, transform_indices = @transform_3, window_bounds = array<i64: 24, 1>}, {transform_indices = @transform_4, window_bounds = array<i64: 1, 24, 128>}]} {
    %c0 = arith.constant 0 : index
    %c0_0 = arith.constant 0 : index
    %c0_1 = arith.constant 0 : index
    %0 = vector.load %arg2[%c0, %c0_0, %c0_1] : memref<1x8x128xf32, #tpu.memory_space<vmem>>, vector<1x8x128xf32>
    %1 = vector.shape_cast %0 : vector<1x8x128xf32> to vector<8x128xf32>
    %c0_2 = arith.constant 0 : index
    %c0_3 = arith.constant 0 : index
    %c0_4 = arith.constant 0 : index
    %2 = vector.load %arg3[%c0_2, %c0_3, %c0_4] : memref<1x8x128xf32, #tpu.memory_space<vmem>>, vector<1x8x128xf32>
    %3 = vector.shape_cast %2 : vector<1x8x128xf32> to vector<8x128xf32>
    %4 = tpu.concatenate %1, %3 in 1 : vector<8x128xf32>, vector<8x128xf32> -> vector<8x256xf32>
    %5 = vector.extract_strided_slice %4 {offsets = [0, 2], sizes = [8, 128], strides = [1, 1]} : vector<8x256xf32> to vector<8x128xf32>
    %6 = vector.extract_strided_slice %4 {offsets = [0, 1], sizes = [8, 128], strides = [1, 1]} : vector<8x256xf32> to vector<8x128xf32>
    %7 = vector.extract_strided_slice %4 {offsets = [0, 0], sizes = [8, 128], strides = [1, 1]} : vector<8x256xf32> to vector<8x128xf32>
    %8 = tpu.concatenate %5, %6, %7 in 0 : vector<8x128xf32>, vector<8x128xf32>, vector<8x128xf32> -> vector<24x128xf32>
    %c0_5 = arith.constant 0 : index
    %c0_6 = arith.constant 0 : index
    %9 = vector.load %arg4[%c0_5, %c0_6] : memref<24x24xf32, #tpu.memory_space<vmem>>, vector<8x24xf32>
    %cst = arith.constant dense<0.000000e+00> : vector<8x128xf32>
    %10 = tpu.matmul %9, %8, %cst {dimension_numbers = #tpu.dot_dimension_numbers<[1], [0], [0], [1], [0, 0, 1, 1], [], []>} : vector<8x24xf32>, vector<24x128xf32>, vector<8x128xf32> -> vector<8x128xf32>
    %c0_7 = arith.constant 0 : index
    %c0_8 = arith.constant 0 : index
    %11 = vector.load %arg5[%c0_7, %c0_8] : memref<24x1xf32, #tpu.memory_space<vmem>>, vector<8x1xf32>
    %12 = vector.broadcast %11 : vector<8x1xf32> to vector<8x128xf32>
    %13 = arith.addf %10, %12 : vector<8x128xf32>
    %c0_9 = arith.constant 0 : index
    %c0_10 = arith.constant 0 : index
    %c0_11 = arith.constant 0 : index
    %14 = vector.load %arg6[%c0_9, %c0_10, %c0_11] : memref<1x24x128xf32, #tpu.memory_space<vmem>>, vector<1x8x128xf32>
    %15 = vector.shape_cast %14 : vector<1x8x128xf32> to vector<8x128xf32>
    %16 = vector.shape_cast %13 : vector<8x128xf32> to vector<1x8x128xf32>
    tpu.vector_store %arg6[%c0_9, %c0_10, %c0_11], %16 {strides = array<i32>} : memref<1x24x128xf32, #tpu.memory_space<vmem>>, vector<1x8x128xf32>,
    %17 = vector.extract_strided_slice %4 {offsets = [0, 4], sizes = [8, 128], strides = [1, 1]} : vector<8x256xf32> to vector<8x128xf32>
    %18 = vector.extract_strided_slice %4 {offsets = [0, 2], sizes = [8, 128], strides = [1, 1]} : vector<8x256xf32> to vector<8x128xf32>
    %19 = vector.extract_strided_slice %4 {offsets = [0, 0], sizes = [8, 128], strides = [1, 1]} : vector<8x256xf32> to vector<8x128xf32>
    %20 = tpu.concatenate %17, %18, %19 in 0 : vector<8x128xf32>, vector<8x128xf32>, vector<8x128xf32> -> vector<24x128xf32>
    %c8 = arith.constant 8 : index
    %c0_12 = arith.constant 0 : index
    %21 = vector.load %arg4[%c8, %c0_12] : memref<24x24xf32, #tpu.memory_space<vmem>>, vector<8x24xf32>
    %cst_13 = arith.constant dense<0.000000e+00> : vector<8x128xf32>
    %22 = tpu.matmul %21, %20, %cst_13 {dimension_numbers = #tpu.dot_dimension_numbers<[1], [0], [0], [1], [0, 0, 1, 1], [], []>} : vector<8x24xf32>, vector<24x128xf32>, vector<8x128xf32> -> vector<8x128xf32>
    %c8_14 = arith.constant 8 : index
    %c0_15 = arith.constant 0 : index
    %23 = vector.load %arg5[%c8_14, %c0_15] : memref<24x1xf32, #tpu.memory_space<vmem>>, vector<8x1xf32>
    %24 = vector.broadcast %23 : vector<8x1xf32> to vector<8x128xf32>
    %25 = arith.addf %22, %24 : vector<8x128xf32>
    %c0_16 = arith.constant 0 : index
    %c8_17 = arith.constant 8 : index
    %c0_18 = arith.constant 0 : index
    %26 = vector.load %arg6[%c0_16, %c8_17, %c0_18] : memref<1x24x128xf32, #tpu.memory_space<vmem>>, vector<1x8x128xf32>
    %27 = vector.shape_cast %26 : vector<1x8x128xf32> to vector<8x128xf32>
    %28 = vector.shape_cast %25 : vector<8x128xf32> to vector<1x8x128xf32>
    tpu.vector_store %arg6[%c0_16, %c8_17, %c0_18], %28 {strides = array<i32>} : memref<1x24x128xf32, #tpu.memory_space<vmem>>, vector<1x8x128xf32>,
    %29 = vector.extract_strided_slice %4 {offsets = [0, 8], sizes = [8, 128], strides = [1, 1]} : vector<8x256xf32> to vector<8x128xf32>
    %30 = vector.extract_strided_slice %4 {offsets = [0, 4], sizes = [8, 128], strides = [1, 1]} : vector<8x256xf32> to vector<8x128xf32>
    %31 = vector.extract_strided_slice %4 {offsets = [0, 0], sizes = [8, 128], strides = [1, 1]} : vector<8x256xf32> to vector<8x128xf32>
    %32 = tpu.concatenate %29, %30, %31 in 0 : vector<8x128xf32>, vector<8x128xf32>, vector<8x128xf32> -> vector<24x128xf32>
    %c16 = arith.constant 16 : index
    %c0_19 = arith.constant 0 : index
    %33 = vector.load %arg4[%c16, %c0_19] : memref<24x24xf32, #tpu.memory_space<vmem>>, vector<8x24xf32>
    %cst_20 = arith.constant dense<0.000000e+00> : vector<8x128xf32>
    %34 = tpu.matmul %33, %32, %cst_20 {dimension_numbers = #tpu.dot_dimension_numbers<[1], [0], [0], [1], [0, 0, 1, 1], [], []>} : vector<8x24xf32>, vector<24x128xf32>, vector<8x128xf32> -> vector<8x128xf32>
    %c16_21 = arith.constant 16 : index
    %c0_22 = arith.constant 0 : index
    %35 = vector.load %arg5[%c16_21, %c0_22] : memref<24x1xf32, #tpu.memory_space<vmem>>, vector<8x1xf32>
    %36 = vector.broadcast %35 : vector<8x1xf32> to vector<8x128xf32>
    %37 = arith.addf %34, %36 : vector<8x128xf32>
    %c0_23 = arith.constant 0 : index
    %c16_24 = arith.constant 16 : index
    %c0_25 = arith.constant 0 : index
    %38 = vector.load %arg6[%c0_23, %c16_24, %c0_25] : memref<1x24x128xf32, #tpu.memory_space<vmem>>, vector<1x8x128xf32>
    %39 = vector.shape_cast %38 : vector<1x8x128xf32> to vector<8x128xf32>
    %40 = vector.shape_cast %37 : vector<8x128xf32> to vector<1x8x128xf32>
    tpu.vector_store %arg6[%c0_23, %c16_24, %c0_25], %40 {strides = array<i32>} : memref<1x24x128xf32, #tpu.memory_space<vmem>>, vector<1x8x128xf32>,
    return
  }
  func.func @transform_0(%arg0: i32, %arg1: i32) -> (i32, i32, i32) {
    %c0_i32 = arith.constant 0 : i32
    %c0_i32_0 = arith.constant 0 : i32
    return %arg0, %c0_i32, %arg1 : i32, i32, i32
  }
  func.func @transform_1(%arg0: i32, %arg1: i32) -> (i32, i32, i32) {
    %c1_i32 = arith.constant 1 : i32
    %0 = arith.addi %arg1, %c1_i32 : i32
    %c0_i32 = arith.constant 0 : i32
    %c0_i32_0 = arith.constant 0 : i32
    return %arg0, %c0_i32, %0 : i32, i32, i32
  }
  func.func @transform_2(%arg0: i32, %arg1: i32) -> (i32, i32) {
    %c0_i32 = arith.constant 0 : i32
    %c0_i32_0 = arith.constant 0 : i32
    %c0_i32_1 = arith.constant 0 : i32
    return %c0_i32, %c0_i32_0 : i32, i32
  }
  func.func @transform_3(%arg0: i32, %arg1: i32) -> (i32, i32) {
    %c0_i32 = arith.constant 0 : i32
    %c0_i32_0 = arith.constant 0 : i32
    %c0_i32_1 = arith.constant 0 : i32
    return %c0_i32, %c0_i32_0 : i32, i32
  }
  func.func @transform_4(%arg0: i32, %arg1: i32) -> (i32, i32, i32) {
    %c0_i32 = arith.constant 0 : i32
    %c0_i32_0 = arith.constant 0 : i32
    return %arg0, %c0_i32, %arg1 : i32, i32, i32
  }
}

</mosaic_0001>

<llo_original>
// kernel: tpu_custom_call.1
$region0: #{tpu_custom_call.1}
  #allocation0 [shape = 'u32[]', space=smem, size = 0x4, offset = 0x4, fixed_abs, tag = 'smem constant byte address 0x4 - core index']
  #allocation1 [shape = 'u32[72,128]{1,0:T(1,128)}', space=vmem, size = 0x9000, scoped, tag = 'internal scratch']
  %s0 = inlined_call_operand.hbm [shape: f32[2,8,256], index: 0, kind: input, shape index: {}]
  %s1 = inlined_call_operand.hbm [shape: f32[2,8,256], index: 1, kind: input, shape index: {}]
  %s2 = inlined_call_operand.vmem [shape: f32[24,24], index: 2, kind: input, shape index: {}]
  %s3 = inlined_call_operand.vmem [shape: f32[24,1], index: 3, kind: input, shape index: {}]
  %s4 = inlined_call_operand.hbm [shape: f32[2,24,128], index: 4, kind: output, shape index: {}]
  %s5 = sld [smem:[#allocation0]]
  $region57: #{tpu_custom_call.1} parent=0
    _
  %s7 = ssub.s32 1, %s5
  %s8 = scalar_select 0, %s7, %s5
  $region1: #{tpu_custom_call.1} parent=0
    #allocation2 [shape = 'u8[8192]{0}', space=vmem, size = 0x2000, scoped, tag = 'input window, operand 0']
    #allocation3 [shape = 's32[2]{0}', space=sflag, size = 0x8, scoped, tag = 'scoped memory for tpu_custom_call.1']
    #allocation4 [shape = 's32[2]{0}', space=sflag, size = 0x8, scoped, tag = 'scoped memory for tpu_custom_call.1']
    #allocation5 [shape = 'u8[8192]{0}', space=vmem, size = 0x2000, scoped, tag = 'input window, operand 1']
    #allocation6 [shape = 's32[2]{0}', space=sflag, size = 0x8, scoped, tag = 'scoped memory for tpu_custom_call.1']
    #allocation7 [shape = 'u8[24576]{0}', space=vmem, size = 0x6000, scoped, tag = 'output window, operand 0']
    %9 = vsyncpa [#allocation3], 0
    %s10 = scalar_lea.sflag [#allocation3], 1
    %11 = vsyncpa %s10, 0
    %12 = vsyncpa [#allocation6], 0
    %s13 = scalar_lea.sflag [#allocation6], 1
    %14 = vsyncpa %s13, 0
    %15 = vsyncpa [#allocation4], 0
    %s16 = scalar_lea.sflag [#allocation4], 1
    %17 = vsyncpa %s16, 0
    loop: start=0, step=1, limit=4
    $region2: #{tpu_custom_call.1} parent=1 // loop_pre_header
      _
    $region3: #{tpu_custom_call.1} parent=1 // loop_header
      %s19 = sphi 0, %s23
      %p20 = scmp.ge.s32.totalorder %s19, 4
      %s26 = sphi 0, %s38
      %s27 = sphi 0, %s34
      %s28 = sphi 0, %s26
      %s29 = sphi 0, %s27
      %s30 = sphi 0, %s28
      %s31 = sphi 0, %s29
      %s43 = sphi 0, %s45
      %s46 = sphi 0, %s43
      %s47 = sphi 0, %s46
      %s63 = sphi 0, %s47
      %s73 = sphi 0, %s75
      %s76 = sphi 0, %s73
      %s77 = sphi 0, %s76
      %s93 = sphi 0, %s77
      %s97 = sphi 0, %s97
      %s99 = sphi 0, %s97
      %s100 = sphi 0, %s99
      %s114 = sphi 0, %s100
      %s118 = sphi 0, %s118
      %s120 = sphi 0, %s118
      %s121 = sphi 0, %s120
      %s135 = sphi 0, %s121
      %s143 = sphi 0, %s145
      %s146 = sphi 0, %s143
      %s147 = sphi 0, %s146
      %s163 = sphi 0, %s147
    $region4: #{tpu_custom_call.1} parent=1 // loop_header_branch
      %22 = sbr.rel (%p20) target = $region8
    $region5: #{tpu_custom_call.1} parent=1 // loop_body
      %s24 = ssub.s32 %s19, 1
      %s25 = ssub.s32 %s19, 2
      %s32 = sadd.s32 1, %s27
      %p33 = scmp.ge.s32.totalorder %s32, 1
      %s34 = scalar_select %p33, 0, %s32
      %s35 = sadd.s32 1, %s26
      %s36 = scalar_select %p33, %s35, %s26
      %p37 = scmp.ge.s32.totalorder %s36, 2
      %s38 = scalar_select %p37, 0, %s36
      %s39 = ssub.s32 %s26, %s38
      %s40 = ssub.s32 %s27, %s34
      %s41 = sor.u32 %s39, %s40
      %p42 = scmp.eq.s32.totalorder %s41, 0
      %s44 = sadd.s32 %s43, 1
      %s45 = scalar_select %p42, %s43, %s44
      %p48 = pneg %p42
      %p49 = scmp.eq.s32.totalorder %s19, 1
      %p50 = por %p48, %p49
      %p51 = scmp.ne.s32.totalorder %s43, %s46
      %p52 = scmp.eq.s32.totalorder %s19, 0
      %p53 = por %p51, %p52
      %p54 = scmp.ne.s32.totalorder %s43, %s46
      %p55 = scmp.eq.s32.totalorder %s24, 1
      %p56 = por %p54, %p55
      %p57 = scmp.ne.s32.totalorder %s46, %s47
      %p58 = scmp.eq.s32.totalorder %s24, 0
      %p59 = por %p57, %p58
      %p60 = scmp.ne.s32.totalorder %s46, %s47
      %p61 = scmp.eq.s32.totalorder %s25, 1
      %p62 = por %p60, %p61
      %p64 = scmp.ne.s32.totalorder %s47, %s63
      %p65 = scmp.eq.s32.totalorder %s25, 0
      %p66 = por %p64, %p65
      %s67 = sadd.s32 %s27, 1
      %s68 = sadd.s32 %s34, 1
      %s69 = ssub.s32 %s26, %s38
      %s70 = ssub.s32 %s67, %s68
      %s71 = sor.u32 %s69, %s70
      %p72 = scmp.eq.s32.totalorder %s71, 0
      %s74 = sadd.s32 %s73, 1
      %s75 = scalar_select %p72, %s73, %s74
      %p78 = pneg %p72
      %p79 = scmp.eq.s32.totalorder %s19, 1
      %p80 = por %p78, %p79
      %p81 = scmp.ne.s32.totalorder %s73, %s76
      %p82 = scmp.eq.s32.totalorder %s19, 0
      %p83 = por %p81, %p82
      %p84 = scmp.ne.s32.totalorder %s73, %s76
      %p85 = scmp.eq.s32.totalorder %s24, 1
      %p86 = por %p84, %p85
      %p87 = scmp.ne.s32.totalorder %s76, %s77
      %p88 = scmp.eq.s32.totalorder %s24, 0
      %p89 = por %p87, %p88
      %p90 = scmp.ne.s32.totalorder %s76, %s77
      %p91 = scmp.eq.s32.totalorder %s25, 1
      %p92 = por %p90, %p91
      %p94 = scmp.ne.s32.totalorder %s77, %s93
      %p95 = scmp.eq.s32.totalorder %s25, 0
      %p96 = por %p94, %p95
      %s98 = sadd.s32 %s97, 1
      %p101 = scmp.eq.s32.totalorder %s19, 1
      %p102 = scmp.ne.s32.totalorder %s97, %s99
      %p103 = scmp.eq.s32.totalorder %s19, 0
      %p104 = por %p102, %p103
      %p105 = scmp.ne.s32.totalorder %s97, %s99
      %p106 = scmp.eq.s32.totalorder %s24, 1
      %p107 = por %p105, %p106
      %p108 = scmp.ne.s32.totalorder %s99, %s100
      %p109 = scmp.eq.s32.totalorder %s24, 0
      %p110 = por %p108, %p109
      %p111 = scmp.ne.s32.totalorder %s99, %s100
      %p112 = scmp.eq.s32.totalorder %s25, 1
      %p113 = por %p111, %p112
      %p115 = scmp.ne.s32.totalorder %s100, %s114
      %p116 = scmp.eq.s32.totalorder %s25, 0
      %p117 = por %p115, %p116
      %s119 = sadd.s32 %s118, 1
      %p122 = scmp.eq.s32.totalorder %s19, 1
      %p123 = scmp.ne.s32.totalorder %s118, %s120
      %p124 = scmp.eq.s32.totalorder %s19, 0
      %p125 = por %p123, %p124
      %p126 = scmp.ne.s32.totalorder %s118, %s120
      %p127 = scmp.eq.s32.totalorder %s24, 1
      %p128 = por %p126, %p127
      %p129 = scmp.ne.s32.totalorder %s120, %s121
      %p130 = scmp.eq.s32.totalorder %s24, 0
      %p131 = por %p129, %p130
      %p132 = scmp.ne.s32.totalorder %s120, %s121
      %p133 = scmp.eq.s32.totalorder %s25, 1
      %p134 = por %p132, %p133
      %p136 = scmp.ne.s32.totalorder %s121, %s135
      %p137 = scmp.eq.s32.totalorder %s25, 0
      %p138 = por %p136, %p137
      %s139 = ssub.s32 %s26, %s38
      %s140 = ssub.s32 %s27, %s34
      %s141 = sor.u32 %s139, %s140
      %p142 = scmp.eq.s32.totalorder %s141, 0
      %s144 = sadd.s32 %s143, 1
      %s145 = scalar_select %p142, %s143, %s144
      %p148 = pneg %p142
      %p149 = scmp.eq.s32.totalorder %s19, 1
      %p150 = por %p148, %p149
      %p151 = scmp.ne.s32.totalorder %s143, %s146
      %p152 = scmp.eq.s32.totalorder %s19, 0
      %p153 = por %p151, %p152
      %p154 = scmp.ne.s32.totalorder %s143, %s146
      %p155 = scmp.eq.s32.totalorder %s24, 1
      %p156 = por %p154, %p155
      %p157 = scmp.ne.s32.totalorder %s146, %s147
      %p158 = scmp.eq.s32.totalorder %s24, 0
      %p159 = por %p157, %p158
      %p160 = scmp.ne.s32.totalorder %s146, %s147
      %p161 = scmp.eq.s32.totalorder %s25, 1
      %p162 = por %p160, %p161
      %p164 = scmp.ne.s32.totalorder %s147, %s163
      %p165 = scmp.eq.s32.totalorder %s25, 0
      %p166 = por %p164, %p165
      %p167 = scmp.le.s32.totalorder 1, %s19
      %p168 = scmp.lt.s32.totalorder %s19, 3
      %p169 = pnand %p167, %p168
      %p170 = pneg %p169
      // Predicated region
      $region9: #{tpu_custom_call.1} parent=5 // pred_check
        _
      $region10: #{tpu_custom_call.1} parent=5 // pred_check_branch
        %172 = sbr.rel (%p169) target = $region12
      $region11: #{tpu_custom_call.1} parent=5 // pred_region
        %s173 = ssub.s32 %s19, 1
        // Predicated region
        $region13: #{tpu_custom_call.1} parent=11 // pred_check
          %p174 = pneg %p110
        $region14: #{tpu_custom_call.1} parent=11 // pred_check_branch
          %176 = sbr.rel (%p174) target = $region16
        $region15: #{tpu_custom_call.1} parent=11 // pred_region
          _
        $region16: #{tpu_custom_call.1} parent=11 // pred_fallthru
          _
        // Predicated region
        $region17: #{tpu_custom_call.1} parent=11 // pred_check
          %p177 = pneg %p131
        $region18: #{tpu_custom_call.1} parent=11 // pred_check_branch
          %179 = sbr.rel (%p177) target = $region20
        $region19: #{tpu_custom_call.1} parent=11 // pred_region
          _
        $region20: #{tpu_custom_call.1} parent=11 // pred_fallthru
          _
      $region12: #{tpu_custom_call.1} parent=5 // pred_fallthru
        _
      %p180 = scmp.lt.s32.totalorder %s19, 2
      // Predicated region
      $region21: #{tpu_custom_call.1} parent=5 // pred_check
        %p181 = pneg %p180
      $region22: #{tpu_custom_call.1} parent=5 // pred_check_branch
        %183 = sbr.rel (%p181) target = $region24
      $region23: #{tpu_custom_call.1} parent=5 // pred_region
        // Predicated region
        $region25: #{tpu_custom_call.1} parent=23 // pred_check
          %p184 = pneg %p53
        $region26: #{tpu_custom_call.1} parent=23 // pred_check_branch
          %186 = sbr.rel (%p184) target = $region28
        $region27: #{tpu_custom_call.1} parent=23 // pred_region
          %s187 = sand.u32 %s43, 1
          %s188 = scalar_lea.sflag [#allocation3], %s187
          %s189 = sand.u32 %s43, 1
          %s190 = smul.addr %s189, 8
          %s191 = scalar_lea.vmem [#allocation2], %s190
          %193 = vsyncadd %s188, 0
          %s194 = smul.addr %s26, 2
          %s195 = sadd.s32 %s27, %s194
          %s196 = smul.addr %s195, 8
          %s197 = scalar_lea.hbm %s0, %s196
          %s199 = sshll.u32 %s197, 4
          %s200 = int_to_ptr.hbm [resolvable:$true] %s199
          %s201 = sshll.u32 %s191, 4
          %s202 = int_to_ptr.vmem [resolvable:$true] %s201
          %204 = dma.hbm_to_vmem [thread:$0]  %s200, 128, %s202, %s188
        $region28: #{tpu_custom_call.1} parent=23 // pred_fallthru
          _
        // Predicated region
        $region29: #{tpu_custom_call.1} parent=23 // pred_check
          %p205 = pneg %p83
        $region30: #{tpu_custom_call.1} parent=23 // pred_check_branch
          %207 = sbr.rel (%p205) target = $region32
        $region31: #{tpu_custom_call.1} parent=23 // pred_region
          %s208 = sand.u32 %s73, 1
          %s209 = scalar_lea.sflag [#allocation6], %s208
          %s210 = sand.u32 %s73, 1
          %s211 = smul.addr %s210, 8
          %s212 = scalar_lea.vmem [#allocation5], %s211
          %s213 = sadd.s32 %s27, 1
          %215 = vsyncadd %s209, 0
          %s216 = smul.addr %s26, 2
          %s217 = sadd.s32 %s213, %s216
          %s218 = smul.addr %s217, 8
          %s219 = scalar_lea.hbm %s1, %s218
          %s221 = sshll.u32 %s219, 4
          %s222 = int_to_ptr.hbm [resolvable:$true] %s221
          %s223 = sshll.u32 %s212, 4
          %s224 = int_to_ptr.vmem [resolvable:$true] %s223
          %226 = dma.hbm_to_vmem [thread:$0]  %s222, 128, %s224, %s209
        $region32: #{tpu_custom_call.1} parent=23 // pred_fallthru
          _
      $region24: #{tpu_custom_call.1} parent=5 // pred_fallthru
        _
      %p227 = scmp.le.s32.totalorder 1, %s19
      %p228 = scmp.lt.s32.totalorder %s19, 3
      %p229 = pnand %p227, %p228
      %p230 = pneg %p229
      // Predicated region
      $region33: #{tpu_custom_call.1} parent=5 // pred_check
        _
      $region34: #{tpu_custom_call.1} parent=5 // pred_check_branch
        %232 = sbr.rel (%p229) target = $region36
      $region35: #{tpu_custom_call.1} parent=5 // pred_region
        %s233 = ssub.s32 %s19, 1
        %s234 = sand.u32 %s46, 1
        %s235 = scalar_lea.sflag [#allocation3], %s234
        %s236 = sand.u32 %s46, 1
        %s237 = smul.addr %s236, 8
        %s238 = scalar_lea.vmem [#allocation2], %s237
        // Predicated region
        $region37: #{tpu_custom_call.1} parent=35 // pred_check
          %p239 = pneg %p59
        $region38: #{tpu_custom_call.1} parent=35 // pred_check_branch
          %241 = sbr.rel (%p239) target = $region40
        $region39: #{tpu_custom_call.1} parent=35 // pred_region
          %243 = dma.done %s235, 128
        $region40: #{tpu_custom_call.1} parent=35 // pred_fallthru
          _
        %s244 = sand.u32 %s76, 1
        %s245 = scalar_lea.sflag [#allocation6], %s244
        %s246 = sand.u32 %s76, 1
        %s247 = smul.addr %s246, 8
        %s248 = scalar_lea.vmem [#allocation5], %s247
        // Predicated region
        $region41: #{tpu_custom_call.1} parent=35 // pred_check
          %p249 = pneg %p89
        $region42: #{tpu_custom_call.1} parent=35 // pred_check_branch
          %251 = sbr.rel (%p249) target = $region44
        $region43: #{tpu_custom_call.1} parent=35 // pred_region
          %253 = dma.done %s245, 128
        $region44: #{tpu_custom_call.1} parent=35 // pred_fallthru
          _
        %s254 = sand.u32 %s46, 1
        %s255 = scalar_lea.sflag [#allocation3], %s254
        %s256 = sand.u32 %s46, 1
        %s257 = smul.addr %s256, 8
        %s258 = scalar_lea.vmem [#allocation2], %s257
        %p259 = pneg %p59
        %p260 = pneg %p56
        %s261 = sand.u32 %s76, 1
        %s262 = scalar_lea.sflag [#allocation6], %s261
        %s263 = sand.u32 %s76, 1
        %s264 = smul.addr %s263, 8
        %s265 = scalar_lea.vmem [#allocation5], %s264
        %p266 = pneg %p89
        %p267 = pneg %p86
        %p268 = pneg %p110
        %p269 = pneg %p107
        %p270 = pneg %p131
        %p271 = pneg %p128
        %p272 = pneg %p159
        %p273 = pneg %p156
        %s274 = sand.u32 %s146, 1
        %s275 = scalar_lea.sflag [#allocation4], %s274
        %s276 = sand.u32 %s146, 1
        %s277 = smul.addr %s276, 24
        %s278 = scalar_lea.vmem [#allocation7], %s277
        %s279 = sadd.s32 %s29, 1
        %v280 = vld [vmem:[%s238] sm:$0xff]
        %v281 = vld [vmem:[%s248] sm:$0xff]
        %284 = vrot.lane.b32.xlu0 %v280, 1
        %v285 = vpop.permute.xlu0 %284
        %286 = vrot.lane.b32.xlu0 %v281, 1
        %v287 = vpop.permute.xlu0 %286
        %vm288 = vcmask 7168
        %v289 = vsel %vm288, %v285, %v287
        %290 = vrot.lane.b32.xlu0 %v280, 2
        %v291 = vpop.permute.xlu0 %290
        %v292 = vld [vmem:[%s2] sm:$0xff]
        %v293 = vld [vmem:[%s3] sm:$0xff]
        %295 = vset.pattern.permute.xlu0 0
        %296 = vperm.xlu0 %295, %v293
        %v297 = vpop.permute.xlu0 %296
        %299 = vrot.lane.b32.xlu0 %v280, 126
        %v300 = vpop.permute.xlu0 %299
        %301 = vrot.lane.b32.xlu0 %v281, 126
        %v302 = vpop.permute.xlu0 %301
        %303 = vrot.lane.b32.xlu0 %v285, 126
        %v304 = vpop.permute.xlu0 %303
        %305 = vrot.lane.b32.xlu0 %v289, 126
        %v306 = vpop.permute.xlu0 %305
        %307 = vrot.lane.b32.xlu0 %v291, 126
        %v308 = vpop.permute.xlu0 %307
        %vm309 = vcmask 1031168
        %v310 = vsel %vm309, %v300, %v302
        %v311 = vsel %vm309, %v304, %v306
        %vm315 = vcmask 195584
        %v317 = vsel %vm315, %v292, 0
        %319 = vmatpush.msra.mxu0 0.0
        %320 = vmatpush.msra.mxu0 0.0
        %321 = vmatpush.msra.mxu0 0.0
        %322 = vmatpush.msra.mxu0 0.0
        %323 = vmatpush.msra.mxu0 0.0
        %324 = vmatpush.msra.mxu0 0.0
        %325 = vmatpush.msra.mxu0 0.0
        %326 = vmatpush.msra.mxu0 0.0
        %327 = vmatpush.msra.mxu0 0.0
        %328 = vmatpush.msra.mxu0 0.0
        %329 = vmatpush.msra.mxu0 0.0
        %330 = vmatpush.msra.mxu0 0.0
        %331 = vmatpush.msra.mxu0 0.0
        %332 = vmatpush.msra.mxu0 %v308
        %333 = vmatpush.msra.mxu0 %v311
        %334 = vmatpush.msra.mxu0 %v310
        %335 = vmatmul.f32.gmra.mxu0 %v317
        %v336 = vpop.f32.mrf.mxu0
        %v337 = vadd.f32 %v297, %v336
        %338 = vdwg.mxu0
        %339 = vst [vmem:[%s278] sm:$0xff] %v337
        %340 = vrot.lane.b32.xlu0 %v281, 2
        %v341 = vpop.permute.xlu0 %340
        %vm342 = vcmask 15360
        %v343 = vsel %vm342, %v291, %v341
        %344 = vrot.lane.b32.xlu0 %v280, 4
        %v345 = vpop.permute.xlu0 %344
        %v346 = vld [vmem:[%s2 + $0x8] sm:$0xff]
        %v347 = vld [vmem:[%s3 + $0x8] sm:$0xff]
        %349 = vset.pattern.permute.xlu0 0
        %350 = vperm.xlu0 %349, %v347
        %v351 = vpop.permute.xlu0 %350
        %353 = vrot.lane.b32.xlu0 %v280, 124
        %v354 = vpop.permute.xlu0 %353
        %355 = vrot.lane.b32.xlu0 %v281, 124
        %v356 = vpop.permute.xlu0 %355
        %357 = vrot.lane.b32.xlu0 %v291, 124
        %v358 = vpop.permute.xlu0 %357
        %359 = vrot.lane.b32.xlu0 %v343, 124
        %v360 = vpop.permute.xlu0 %359
        %361 = vrot.lane.b32.xlu0 %v345, 124
        %v362 = vpop.permute.xlu0 %361
        %vm363 = vcmask 1014784
        %v364 = vsel %vm363, %v354, %v356
        %v365 = vsel %vm363, %v358, %v360
        %v370 = vsel %vm315, %v346, 0
        %372 = vmatpush.msra.mxu0 0.0
        %373 = vmatpush.msra.mxu0 0.0
        %374 = vmatpush.msra.mxu0 0.0
        %375 = vmatpush.msra.mxu0 0.0
        %376 = vmatpush.msra.mxu0 0.0
        %377 = vmatpush.msra.mxu0 0.0
        %378 = vmatpush.msra.mxu0 0.0
        %379 = vmatpush.msra.mxu0 0.0
        %380 = vmatpush.msra.mxu0 0.0
        %381 = vmatpush.msra.mxu0 0.0
        %382 = vmatpush.msra.mxu0 0.0
        %383 = vmatpush.msra.mxu0 0.0
        %384 = vmatpush.msra.mxu0 0.0
        %385 = vmatpush.msra.mxu0 %v362
        %386 = vmatpush.msra.mxu0 %v365
        %387 = vmatpush.msra.mxu0 %v364
        %388 = vmatmul.f32.gmra.mxu0 %v370
        %v389 = vpop.f32.mrf.mxu0
        %v390 = vadd.f32 %v351, %v389
        %391 = vdwg.mxu0
        %392 = vst [vmem:[%s278 + $0x8] sm:$0xff] %v390
        %393 = vrot.lane.b32.xlu0 %v281, 4
        %v394 = vpop.permute.xlu0 %393
        %vm395 = vcmask 31744
        %v396 = vsel %vm395, %v345, %v394
        %397 = vrot.lane.b32.xlu0 %v280, 8
        %v398 = vpop.permute.xlu0 %397
        %v399 = vld [vmem:[%s2 + $0x10] sm:$0xff]
        %v400 = vld [vmem:[%s3 + $0x10] sm:$0xff]
        %402 = vset.pattern.permute.xlu0 0
        %403 = vperm.xlu0 %402, %v400
        %v404 = vpop.permute.xlu0 %403
        %406 = vrot.lane.b32.xlu0 %v280, 120
        %v407 = vpop.permute.xlu0 %406
        %408 = vrot.lane.b32.xlu0 %v281, 120
        %v409 = vpop.permute.xlu0 %408
        %410 = vrot.lane.b32.xlu0 %v345, 120
        %v411 = vpop.permute.xlu0 %410
        %412 = vrot.lane.b32.xlu0 %v396, 120
        %v413 = vpop.permute.xlu0 %412
        %414 = vrot.lane.b32.xlu0 %v398, 120
        %v415 = vpop.permute.xlu0 %414
        %vm416 = vcmask 982016
        %v417 = vsel %vm416, %v407, %v409
        %v418 = vsel %vm416, %v411, %v413
        %v423 = vsel %vm315, %v399, 0
        %425 = vmatpush.msra.mxu0 0.0
        %426 = vmatpush.msra.mxu0 0.0
        %427 = vmatpush.msra.mxu0 0.0
        %428 = vmatpush.msra.mxu0 0.0
        %429 = vmatpush.msra.mxu0 0.0
        %430 = vmatpush.msra.mxu0 0.0
        %431 = vmatpush.msra.mxu0 0.0
        %432 = vmatpush.msra.mxu0 0.0
        %433 = vmatpush.msra.mxu0 0.0
        %434 = vmatpush.msra.mxu0 0.0
        %435 = vmatpush.msra.mxu0 0.0
        %436 = vmatpush.msra.mxu0 0.0
        %437 = vmatpush.msra.mxu0 0.0
        %438 = vmatpush.msra.mxu0 %v415
        %439 = vmatpush.msra.mxu0 %v418
        %440 = vmatpush.msra.mxu0 %v417
        %441 = vmatmul.f32.gmra.mxu0 %v423
        %v442 = vpop.f32.mrf.mxu0
        %v443 = vadd.f32 %v404, %v442
        %444 = vdwg.mxu0
        %445 = vst [vmem:[%s278 + $0x10] sm:$0xff] %v443
        %s446 = sand.u32 %s146, 1
        %s447 = scalar_lea.sflag [#allocation4], %s446
        %s448 = sand.u32 %s146, 1
        %s449 = smul.addr %s448, 24
        %s450 = scalar_lea.vmem [#allocation7], %s449
        // Predicated region
        $region45: #{tpu_custom_call.1} parent=35 // pred_check
          %p451 = pneg %p156
        $region46: #{tpu_custom_call.1} parent=35 // pred_check_branch
          %453 = sbr.rel (%p451) target = $region48
        $region47: #{tpu_custom_call.1} parent=35 // pred_region
          %455 = vsyncadd %s447, 0
          %s456 = smul.addr %s28, 3
          %s457 = sadd.s32 %s29, %s456
          %s458 = smul.addr %s457, 8
          %s459 = scalar_lea.hbm %s4, %s458
          %s460 = sshll.u32 %s450, 4
          %s461 = int_to_ptr.vmem [resolvable:$true] %s460
          %s462 = sshll.u32 %s459, 4
          %s463 = int_to_ptr.hbm [resolvable:$true] %s462
          %468 = dma.vmem_to_hbm [thread:$0]  %s461, 384, %s463, %s447, 128, 128, 8
        $region48: #{tpu_custom_call.1} parent=35 // pred_fallthru
          _
      $region36: #{tpu_custom_call.1} parent=5 // pred_fallthru
        _
      %p469 = scmp.le.s32.totalorder 2, %s19
      // Predicated region
      $region49: #{tpu_custom_call.1} parent=5 // pred_check
        %p470 = pneg %p469
      $region50: #{tpu_custom_call.1} parent=5 // pred_check_branch
        %472 = sbr.rel (%p470) target = $region52
      $region51: #{tpu_custom_call.1} parent=5 // pred_region
        %s473 = ssub.s32 %s19, 2
        // Predicated region
        $region53: #{tpu_custom_call.1} parent=51 // pred_check
          %p474 = pneg %p162
        $region54: #{tpu_custom_call.1} parent=51 // pred_check_branch
          %476 = sbr.rel (%p474) target = $region56
        $region55: #{tpu_custom_call.1} parent=51 // pred_region
          %s477 = sand.u32 %s147, 1
          %s478 = scalar_lea.sflag [#allocation4], %s477
          %s479 = sand.u32 %s147, 1
          %s480 = smul.addr %s479, 24
          %s481 = scalar_lea.vmem [#allocation7], %s480
          %483 = dma.done %s478, 384
        $region56: #{tpu_custom_call.1} parent=51 // pred_fallthru
          _
      $region52: #{tpu_custom_call.1} parent=5 // pred_fallthru
        _
    $region6: #{tpu_custom_call.1} parent=1 // loop_footer
      %s23 = sadd.s32 1, %s19
    $region7: #{tpu_custom_call.1} parent=1 // loop_footer_branch
      %18 = sbr.rel target = $region3
    $region8: #{tpu_custom_call.1} parent=1 // loop_exit
      _
    %484 = vsyncpa [#allocation3], 1
    %s485 = scalar_lea.sflag [#allocation3], 1
    %486 = vsyncpa %s485, 1
    %487 = vsyncpa [#allocation6], 1
    %s488 = scalar_lea.sflag [#allocation6], 1
    %489 = vsyncpa %s488, 1
    %490 = vsyncpa [#allocation4], 1
    %s491 = scalar_lea.sflag [#allocation4], 1
    %492 = vsyncpa %s491, 1

</llo_original>
